<compile_context>
chip_gen: v7x
topology: tpu7x:2x2x1
jax: 0.10.0
libtpu: 0.0.40
codegen_flags: <defaults>
</compile_context>

<pallas_src>
import functools

import jax
import jax.numpy as jnp
from jax.experimental import pallas as pl
from jax.experimental.pallas import tpu as pltpu


def _round_up(x: int, m: int) -> int:
    return ((x + m - 1) // m) * m


def _mlp_cls_kernel(x_ref, w1_ref, b1_ref, w2_ref, b2_ref, o_ref, *,
                    valid_rows: int, padded_rows: int):
    """One block: full batch x full hidden x one lane-tile of the output.

    x_ref  : (Bp, Ip)     padded input (mxu dtype)
    w1_ref : (Ip, Hp)     padded first-layer weight (mxu dtype)
    b1_ref : (1, Hp)      f32
    w2_ref : (Hp, To)     current output tile of second-layer weight (mxu dtype)
    b2_ref : (1, To)      f32
    o_ref  : (Bp, To)     current output tile (lane-dense f32 store)
    """
    # First layer. In the tiled path this is recomputed per O-tile: with Bp<=8
    # it is negligible MXU work, and dropping the cross-tile carry lets the
    # O axis be "parallel" (v7x's two TensorCores can split the tiles).
    pre = jnp.dot(x_ref[...], w1_ref[...],
                  preferred_element_type=jnp.float32) + b1_ref[...]
    h = jax.nn.sigmoid(pre)                                  # f32 elementwise

    # Second layer for this lane-tile of the output.
    logits = jnp.dot(h.astype(w2_ref.dtype), w2_ref[...],
                     preferred_element_type=jnp.float32) + b2_ref[...]

    # Softmax over the batch (sublane) axis, entirely inside this block.
    # NOTE: the max below includes padded batch rows (logits sigmoid(b1)@W2+b2,
    # not -inf).  That is harmless — softmax is shift-invariant — so do NOT
    # "fix" it; only the exp/denominator mask below affects the numerics.
    m = jnp.max(logits, axis=0, keepdims=True)               # (1, To)
    e = jnp.exp(logits - m)                                   # (Bp, To)
    if valid_rows < padded_rows:                              # static branch
        row_ids = jax.lax.broadcasted_iota(jnp.int32, (padded_rows, 1), 0)
        e = e * (row_ids < valid_rows).astype(jnp.float32)    # zero padded rows
    denom = jnp.sum(e, axis=0, keepdims=True)                 # (1, To)
    # Exact reciprocal (division): rows must sum to exactly 1 for downstream
    # code that treats the output as normalized probabilities.
    o_ref[...] = (e / denom).astype(o_ref.dtype)


def prepare_mlp_cls_params(w1, b1, w2, b2, *, mxu_dtype=jnp.float32):
    """Pad & cast the weights ONCE (hoisted out of the per-call path).

    w1: (I, H), b1: (H,), w2: (H, O), b2: (O,)  — math layout (x @ W), i.e.
    the transpose of nn.Linear's stored (out, in) weight.

    Returns (w1p, b1p, w2p, b2p) zero-padded to TPU-native (8,128) tiles.
    W1/W2 are stored in `mxu_dtype` (bf16 halves their DMA bytes on every
    generation, including v5e); biases stay f32.
    """
    I, H = w1.shape
    O = w2.shape[1]
    Ip, Hp, Op = _round_up(I, 128), _round_up(H, 128), _round_up(O, 128)
    f32 = jnp.float32
    w1p = jnp.zeros((Ip, Hp), f32).at[:I, :H].set(w1.astype(f32)).astype(mxu_dtype)
    b1p = jnp.zeros((1, Hp), f32).at[0, :H].set(b1.astype(f32))
    w2p = jnp.zeros((Hp, Op), f32).at[:H, :O].set(w2.astype(f32)).astype(mxu_dtype)
    b2p = jnp.zeros((1, Op), f32).at[0, :O].set(b2.astype(f32))
    return w1p, b1p, w2p, b2p


@functools.partial(jax.jit, static_argnames=("out_size",))
def mlp_cls_forward(x, w1p, b1p, w2p, b2p, *, out_size):
    """x: (B, I) f32.  Padded params from prepare_mlp_cls_params.  -> (1, B, O)."""
    B, I = x.shape
    Ip, Hp = w1p.shape
    Op = w2p.shape[1]
    Bp = _round_up(max(B, 1), 8)
    mxu_dtype = w1p.dtype
    itemsize = jnp.dtype(mxu_dtype).itemsize

    # The ONLY per-call host-side prep: pad (and, for bf16, cast) x.
    # NOTE: if the caller ever has many independent inferences, batch them here
    # so Bp grows toward 128/256 — that is the real MXU-occupancy lever.
    xp = jnp.zeros((Bp, Ip), mxu_dtype).at[:B, :I].set(x.astype(mxu_dtype))

    kernel = functools.partial(_mlp_cls_kernel, valid_rows=B, padded_rows=Bp)

    # 256-wide O tiles match v6e/v7x's 2x256 MXU; 128 fallback keeps lane-dense
    # stores for any padded O.
    tile_o = 256 if Op % 256 == 0 else 128
    n_tiles = Op // tile_o

    if n_tiles <= 1:
        # Flat, grid-less call: one VMEM-resident block, no grid/pipeline
        # overhead, no scf.if — the common case (O=8 -> Op=128).
        cost = pl.CostEstimate(
            flops=2 * Bp * Ip * Hp + 2 * Bp * Hp * Op,
            transcendentals=Bp * Hp + Bp * Op,          # sigmoid + exp
            bytes_accessed=(Bp * Ip + Ip * Hp + Hp * Op) * itemsize
                           + (Hp + Op + Bp * Op) * 4,
        )
        out = pl.pallas_call(
            kernel,
            out_shape=jax.ShapeDtypeStruct((Bp, Op), jnp.float32),
            compiler_params=pltpu.CompilerParams(
                vmem_limit_bytes=32 * 1024 * 1024),      # safe on v5e/v6e/v7x
            cost_estimate=cost,
        )(xp, w1p, b1p, w2p, b2p)
    else:
        # Tiled path: tile the LANE axis of the output (softmax reduces over
        # the batch axis, so the whole batch stays in one block).
        cost = pl.CostEstimate(
            flops=2 * Bp * Ip * Hp * n_tiles + 2 * Bp * Hp * Op,
            transcendentals=Bp * Hp * n_tiles + Bp * Op,
            bytes_accessed=(Bp * Ip + Ip * Hp + Hp * Op) * itemsize
                           + (Hp + Op + Bp * Op) * 4,
        )

        def const_spec(shape):
            # Grid-constant block (index_map always (0,0)): single-buffer it —
            # W1 is the largest resident buffer and never re-DMAs, so the
            # second pipeline copy is pure VMEM waste (matters on v7x's 64 MiB).
            return pl.BlockSpec(shape, lambda j: (0, 0),
                                pipeline_mode=pl.Buffered(buffer_count=1))

        out = pl.pallas_call(
            kernel,
            out_shape=jax.ShapeDtypeStruct((Bp, Op), jnp.float32),
            grid_spec=pltpu.PrefetchScalarGridSpec(
                num_scalar_prefetch=0,
                grid=(n_tiles,),
                in_specs=[
                    const_spec((Bp, Ip)),                          # x
                    const_spec((Ip, Hp)),                          # W1
                    const_spec((1, Hp)),                           # b1
                    pl.BlockSpec((Hp, tile_o), lambda j: (0, j)),  # W2 tile
                    pl.BlockSpec((1, tile_o), lambda j: (0, j)),   # b2 tile
                ],
                out_specs=pl.BlockSpec((Bp, tile_o), lambda j: (0, j)),
            ),
            compiler_params=pltpu.CompilerParams(
                # h is recomputed per tile -> no cross-tile carry -> the O axis
                # can be split across v7x's two TensorCores.
                dimension_semantics=("parallel",),
                vmem_limit_bytes=32 * 1024 * 1024,
            ),
            cost_estimate=cost,
        )(xp, w1p, b1p, w2p, b2p)

    # Strip padding, then unsqueeze(0) like the torch module.
    return out[None, :B, :out_size]


def init_params(key, input_size, hidden_size, output_size):
    """Deterministic init mimicking nn.Linear default (uniform ±1/sqrt(fan_in))."""
    k1, k2, k3, k4 = jax.random.split(key, 4)
    lim1 = 1.0 / jnp.sqrt(jnp.float32(input_size))
    lim2 = 1.0 / jnp.sqrt(jnp.float32(hidden_size))
    w1 = jax.random.uniform(k1, (input_size, hidden_size), jnp.float32, -lim1, lim1)
    b1 = jax.random.uniform(k2, (hidden_size,), jnp.float32, -lim1, lim1)
    w2 = jax.random.uniform(k3, (hidden_size, output_size), jnp.float32, -lim2, lim2)
    b2 = jax.random.uniform(k4, (output_size,), jnp.float32, -lim2, lim2)
    return w1, b1, w2, b2


def _reference(x, w1, b1, w2, b2):
    h = jax.nn.sigmoid(x @ w1 + b1)
    scores = (h @ w2 + b2)[None]                 # (1, B, O)
    return jax.nn.softmax(scores, axis=1)        # softmax over dim=1 (batch)


if __name__ == "__main__":
    key = jax.random.PRNGKey(0)
    k_x, k_p, k_x2, k_p2 = jax.random.split(key, 4)

    # ---- Default module-sized shapes: single-O-tile (grid-less) fast path.
    batch, input_size, hidden_size, output_size = 2, 16, 32, 8
    x = jax.random.normal(k_x, (batch, input_size), jnp.float32)
    w1, b1, w2, b2 = init_params(k_p, input_size, hidden_size, output_size)
    ref = _reference(x, w1, b1, w2, b2)

    # f32 MXU path (weights padded/cast once, reused every call).
    params_f32 = prepare_mlp_cls_params(w1, b1, w2, b2)
    out = jax.block_until_ready(
        mlp_cls_forward(x, *params_f32, out_size=output_size))
    assert out.shape == (1, batch, output_size)
    assert jnp.allclose(out, ref, atol=2e-3, rtol=2e-3)
    # Exact-reciprocal softmax: every output column sums to 1 over the batch.
    assert jnp.allclose(jnp.sum(out, axis=1), 1.0, atol=1e-5)

    # bf16 MXU path (recommended on v5e/v6e/v7x; elementwise math stays f32).
    params_bf16 = prepare_mlp_cls_params(w1, b1, w2, b2, mxu_dtype=jnp.bfloat16)
    out_bf16 = jax.block_until_ready(
        mlp_cls_forward(x, *params_bf16, out_size=output_size))
    assert out_bf16.shape == (1, batch, output_size)
    assert jnp.allclose(out_bf16, ref, atol=3e-2, rtol=3e-2)

    # ---- Larger output: exercises the tiled "parallel" O-axis path, the
    #      single-buffered constant blocks, and the batch-padding mask (B=5).
    batch2, in2, hid2, out2 = 5, 48, 64, 512
    x2 = jax.random.normal(k_x2, (batch2, in2), jnp.float32)
    w1b, b1b, w2b, b2b = init_params(k_p2, in2, hid2, out2)
    ref2 = _reference(x2, w1b, b1b, w2b, b2b)
    params2 = prepare_mlp_cls_params(w1b, b1b, w2b, b2b)
    out_tiled = jax.block_until_ready(
        mlp_cls_forward(x2, *params2, out_size=out2))
    assert out_tiled.shape == (1, batch2, out2)
    assert jnp.allclose(out_tiled, ref2, atol=2e-3, rtol=2e-3)

    # TODO(synk): saved_log_probs / rewards lists in the torch module are
    # training-time bookkeeping, not part of the forward pass — not translated.
    print("KERNEL_OK")
</pallas_src>

<mosaic_0001>
module attributes {stable_mosaic.version = 11 : i64} {
  func.func @_mlp_cls_kernel(%arg0: memref<8x128xf32, #tpu.memory_space<vmem>>, %arg1: memref<128x128xf32, #tpu.memory_space<vmem>>, %arg2: memref<1x128xf32, #tpu.memory_space<vmem>>, %arg3: memref<128x128xf32, #tpu.memory_space<vmem>>, %arg4: memref<1x128xf32, #tpu.memory_space<vmem>>, %arg5: memref<8x128xf32, #tpu.memory_space<vmem>>) attributes {dimension_semantics = [], scalar_prefetch = 0 : i64, scratch_operands = 0 : i64, tpu.core_type = #tpu.core_type<tc>} {
    %c0 = arith.constant 0 : index
    %c0_0 = arith.constant 0 : index
    %0 = vector.load %arg0[%c0, %c0_0] : memref<8x128xf32, #tpu.memory_space<vmem>>, vector<8x128xf32>
    %c0_1 = arith.constant 0 : index
    %c0_2 = arith.constant 0 : index
    %1 = vector.load %arg1[%c0_1, %c0_2] : memref<128x128xf32, #tpu.memory_space<vmem>>, vector<128x128xf32>
    %cst = arith.constant dense<0.000000e+00> : vector<8x128xf32>
    %2 = tpu.matmul %0, %1, %cst {dimension_numbers = #tpu.dot_dimension_numbers<[1], [0], [0], [1], [0, 0, 1, 1], [], []>} : vector<8x128xf32>, vector<128x128xf32>, vector<8x128xf32> -> vector<8x128xf32>
    %c0_3 = arith.constant 0 : index
    %c0_4 = arith.constant 0 : index
    %3 = vector.load %arg2[%c0_3, %c0_4] : memref<1x128xf32, #tpu.memory_space<vmem>>, vector<1x128xf32>
    %4 = vector.broadcast %3 : vector<1x128xf32> to vector<8x128xf32>
    %5 = arith.addf %2, %4 : vector<8x128xf32>
    %6 = arith.negf %5 : vector<8x128xf32>
    %7 = math.exp %6 : vector<8x128xf32>
    %cst_5 = arith.constant 1.000000e+00 : f32
    %8 = vector.broadcast %cst_5 : f32 to vector<8x128xf32>
    %9 = arith.addf %8, %7 : vector<8x128xf32>
    %10 = arith.divf %8, %9 : vector<8x128xf32>
    %c0_6 = arith.constant 0 : index
    %c0_7 = arith.constant 0 : index
    %11 = vector.load %arg3[%c0_6, %c0_7] : memref<128x128xf32, #tpu.memory_space<vmem>>, vector<128x128xf32>
    %cst_8 = arith.constant dense<0.000000e+00> : vector<8x128xf32>
    %12 = tpu.matmul %10, %11, %cst_8 {dimension_numbers = #tpu.dot_dimension_numbers<[1], [0], [0], [1], [0, 0, 1, 1], [], []>} : vector<8x128xf32>, vector<128x128xf32>, vector<8x128xf32> -> vector<8x128xf32>
    %c0_9 = arith.constant 0 : index
    %c0_10 = arith.constant 0 : index
    %13 = vector.load %arg4[%c0_9, %c0_10] : memref<1x128xf32, #tpu.memory_space<vmem>>, vector<1x128xf32>
    %14 = vector.broadcast %13 : vector<1x128xf32> to vector<8x128xf32>
    %15 = arith.addf %12, %14 : vector<8x128xf32>
    %cst_11 = arith.constant dense<0xFF800000> : vector<128xf32>
    %16 = vector.multi_reduction <maximumf>, %15, %cst_11 [0] : vector<8x128xf32> to vector<128xf32>
    %17 = vector.shape_cast %16 : vector<128xf32> to vector<1x128xf32>
    %18 = vector.broadcast %17 : vector<1x128xf32> to vector<8x128xf32>
    %19 = arith.subf %15, %18 : vector<8x128xf32>
    %20 = math.exp %19 : vector<8x128xf32>
    %21 = tpu.iota {dimensions = array<i32: 0>} : vector<8x1xi32>
    %c2_i32 = arith.constant 2 : i32
    %22 = vector.broadcast %c2_i32 : i32 to vector<8x1xi32>
    %23 = arith.cmpi slt, %21, %22 : vector<8x1xi32>
    %24 = arith.extui %23 : vector<8x1xi1> to vector<8x1xi32>
    %25 = arith.sitofp %24 : vector<8x1xi32> to vector<8x1xf32>
    %26 = vector.broadcast %25 : vector<8x1xf32> to vector<8x128xf32>
    %27 = arith.mulf %20, %26 : vector<8x128xf32>
    %cst_12 = arith.constant dense<0.000000e+00> : vector<128xf32>
    %28 = vector.multi_reduction <add>, %27, %cst_12 [0] : vector<8x128xf32> to vector<128xf32>
    %29 = vector.shape_cast %28 : vector<128xf32> to vector<1x128xf32>
    %30 = vector.broadcast %29 : vector<1x128xf32> to vector<8x128xf32>
    %31 = arith.divf %27, %30 : vector<8x128xf32>
    %c0_13 = arith.constant 0 : index
    %c0_14 = arith.constant 0 : index
    %32 = vector.load %arg5[%c0_13, %c0_14] : memref<8x128xf32, #tpu.memory_space<vmem>>, vector<8x128xf32>
    tpu.vector_store %arg5[%c0_13, %c0_14], %31 {strides = array<i32>} : memref<8x128xf32, #tpu.memory_space<vmem>>, vector<8x128xf32>,
    return
  }
}

</mosaic_0001>

<llo_original>
// kernel: mlp_cls_forward.1
$region0: #{mlp_cls_forward.1}
  #allocation0 [shape = 'u32[]', space=smem, size = 0x4, offset = 0x4, fixed_abs, tag = 'smem constant byte address 0x4 - core index']
  #allocation1 [shape = 'u32[144,128]{1,0:T(1,128)}', space=vmem, size = 0x12000, scoped, tag = 'internal scratch']
  %s0 = inlined_call_operand.vmem [shape: f32[8,128], index: 0, kind: input, shape index: {}]
  %s1 = inlined_call_operand.hbm [shape: f32[128,128], index: 1, kind: input, shape index: {}]
  %s2 = inlined_call_operand.vmem [shape: f32[1,128], index: 2, kind: input, shape index: {}]
  %s3 = inlined_call_operand.hbm [shape: f32[128,128], index: 3, kind: input, shape index: {}]
  %s4 = inlined_call_operand.vmem [shape: f32[1,128], index: 4, kind: input, shape index: {}]
  %s5 = inlined_call_operand.vmem [shape: f32[8,128], index: 5, kind: output, shape index: {}]
  %s6 = sld [smem:[#allocation0]]
  $region38: #{mlp_cls_forward.1} parent=0
    _
  %s8 = ssub.s32 1, %s6
  %s9 = scalar_select 0, %s8, %s6
  $region1: #{mlp_cls_forward.1} parent=0
    #allocation2 [shape = 'u8[65536]{0}', space=vmem, size = 0x10000, scoped, tag = 'input window, operand 1, single buffered']
    #allocation3 [shape = 's32[1]{0}', space=sflag, size = 0x4, scoped, tag = 'scoped memory for mlp_cls_forward.1']
    #allocation4 [shape = 'u8[65536]{0}', space=vmem, size = 0x10000, scoped, tag = 'input window, operand 3, single buffered']
    #allocation5 [shape = 's32[1]{0}', space=sflag, size = 0x4, scoped, tag = 'scoped memory for mlp_cls_forward.1']
    %10 = vsyncpa [#allocation3], 0
    %11 = vsyncpa [#allocation5], 0
    // Predicated region
    $region2: #{mlp_cls_forward.1} parent=1 // pred_check
      _
    $region3: #{mlp_cls_forward.1} parent=1 // pred_check_branch
      %13 = sbr.rel (0) target = $region5
    $region4: #{mlp_cls_forward.1} parent=1 // pred_region
      _
    $region5: #{mlp_cls_forward.1} parent=1 // pred_fallthru
      _
    // Predicated region
    $region6: #{mlp_cls_forward.1} parent=1 // pred_check
      _
    $region7: #{mlp_cls_forward.1} parent=1 // pred_check_branch
      %15 = sbr.rel (0) target = $region9
    $region8: #{mlp_cls_forward.1} parent=1 // pred_region
      %s17 = ssub.s32 2048, 2048
      %18 = vsyncadd [#allocation3], %s17
      %s19 = sshll.u32 [#allocation2], 4
      %s20 = int_to_ptr.vmem [resolvable:$true] %s19
      %25 = dma.hbm_to_vmem [thread:$0]  %s1, 2048, %s20, [#allocation3], 128, 128, 8
    $region9: #{mlp_cls_forward.1} parent=1 // pred_fallthru
      _
    // Predicated region
    $region10: #{mlp_cls_forward.1} parent=1 // pred_check
      _
    $region11: #{mlp_cls_forward.1} parent=1 // pred_check_branch
      %27 = sbr.rel (0) target = $region13
    $region12: #{mlp_cls_forward.1} parent=1 // pred_region
      _
    $region13: #{mlp_cls_forward.1} parent=1 // pred_fallthru
      _
    // Predicated region
    $region14: #{mlp_cls_forward.1} parent=1 // pred_check
      _
    $region15: #{mlp_cls_forward.1} parent=1 // pred_check_branch
      %29 = sbr.rel (0) target = $region17
    $region16: #{mlp_cls_forward.1} parent=1 // pred_region
      %s31 = ssub.s32 2048, 2048
      %32 = vsyncadd [#allocation5], %s31
      %s33 = sshll.u32 [#allocation4], 4
      %s34 = int_to_ptr.vmem [resolvable:$true] %s33
      %39 = dma.hbm_to_vmem [thread:$0]  %s3, 2048, %s34, [#allocation5], 128, 128, 8
    $region17: #{mlp_cls_forward.1} parent=1 // pred_fallthru
      _
    // Predicated region
    $region18: #{mlp_cls_forward.1} parent=1 // pred_check
      _
    $region19: #{mlp_cls_forward.1} parent=1 // pred_check_branch
      %41 = sbr.rel (0) target = $region21
    $region20: #{mlp_cls_forward.1} parent=1 // pred_region
      _
    $region21: #{mlp_cls_forward.1} parent=1 // pred_fallthru
      _
    // Predicated region
    $region22: #{mlp_cls_forward.1} parent=1 // pred_check
      _
    $region23: #{mlp_cls_forward.1} parent=1 // pred_check_branch
      %43 = sbr.rel (0) target = $region25
    $region24: #{mlp_cls_forward.1} parent=1 // pred_region
      %44 = dma.done [#allocation3], 2048
    $region25: #{mlp_cls_forward.1} parent=1 // pred_fallthru
      _
    // Predicated region
    $region26: #{mlp_cls_forward.1} parent=1 // pred_check
      _
    $region27: #{mlp_cls_forward.1} parent=1 // pred_check_branch
      %46 = sbr.rel (0) target = $region29
    $region28: #{mlp_cls_forward.1} parent=1 // pred_region
      %47 = dma.done [#allocation5], 2048
    $region29: #{mlp_cls_forward.1} parent=1 // pred_fallthru
      _
    %v48 = vld [vmem:[%s0] sm:$0xff]
    %v49 = vld [vmem:[#allocation2] sm:$0xff]
    %v50 = vld [vmem:[#allocation2 + $0x8] sm:$0xff]
    %v51 = vld [vmem:[#allocation2 + $0x10] sm:$0xff]
    %v52 = vld [vmem:[#allocation2 + $0x18] sm:$0xff]
    %v53 = vld [vmem:[#allocation2 + $0x20] sm:$0xff]
    %v54 = vld [vmem:[#allocation2 + $0x28] sm:$0xff]
    %v55 = vld [vmem:[#allocation2 + $0x30] sm:$0xff]
    %v56 = vld [vmem:[#allocation2 + $0x38] sm:$0xff]
    %v57 = vld [vmem:[#allocation2 + $0x40] sm:$0xff]
    %v58 = vld [vmem:[#allocation2 + $0x48] sm:$0xff]
    %v59 = vld [vmem:[#allocation2 + $0x50] sm:$0xff]
    %v60 = vld [vmem:[#allocation2 + $0x58] sm:$0xff]
    %v61 = vld [vmem:[#allocation2 + $0x60] sm:$0xff]
    %v62 = vld [vmem:[#allocation2 + $0x68] sm:$0xff]
    %v63 = vld [vmem:[#allocation2 + $0x70] sm:$0xff]
    %v64 = vld [vmem:[#allocation2 + $0x78] sm:$0xff]
    %v65 = vld [vmem:[%s2] sm:$0x1]
    %v67 = vlaneseq
    %v68 = vshrl.u32 %v67, 7
    %v69 = vsub.s32 0, %v68
    %v70 = vrot.slane %v65, %v69
    %72 = vmatprep.subr.mxu0 0.0
    %73 = vmatpush1.msra.mxu0 %v49
    %74 = vmatprep.subr.mxu0 0.0
    %75 = vmatpush1.msra.mxu0 %v50
    %76 = vmatprep.subr.mxu0 0.0
    %77 = vmatpush1.msra.mxu0 %v51
    %78 = vmatprep.subr.mxu0 0.0
    %79 = vmatpush1.msra.mxu0 %v52
    %80 = vmatprep.subr.mxu0 0.0
    %81 = vmatpush1.msra.mxu0 %v53
    %82 = vmatprep.subr.mxu0 0.0
    %83 = vmatpush1.msra.mxu0 %v54
    %84 = vmatprep.subr.mxu0 0.0
    %85 = vmatpush1.msra.mxu0 %v55
    %86 = vmatprep.subr.mxu0 0.0
    %87 = vmatpush1.msra.mxu0 %v56
    %88 = vmatprep.subr.mxu0 0.0
    %89 = vmatpush1.msra.mxu0 %v57
    %90 = vmatprep.subr.mxu0 0.0
    %91 = vmatpush1.msra.mxu0 %v58
    %92 = vmatprep.subr.mxu0 0.0
    %93 = vmatpush1.msra.mxu0 %v59
    %94 = vmatprep.subr.mxu0 0.0
    %95 = vmatpush1.msra.mxu0 %v60
    %96 = vmatprep.subr.mxu0 0.0
    %97 = vmatpush1.msra.mxu0 %v61
    %98 = vmatprep.subr.mxu0 0.0
    %99 = vmatpush1.msra.mxu0 %v62
    %100 = vmatprep.subr.mxu0 0.0
    %101 = vmatpush1.msra.mxu0 %v63
    %102 = vmatprep.subr.mxu0 0.0
    %103 = vmatpush1.msra.mxu0 %v64
    %104 = vmatprep.subr.mxu0 0.0
    %105 = vmatpush1.msra.mxu0 0.0
    %106 = vmatprep.subr.mxu0 0.0
    %107 = vmatpush1.msra.mxu0 0.0
    %108 = vmatprep.subr.mxu0 0.0
    %109 = vmatpush1.msra.mxu0 0.0
    %110 = vmatprep.subr.mxu0 0.0
    %111 = vmatpush1.msra.mxu0 0.0
    %112 = vmatprep.subr.mxu0 0.0
    %113 = vmatpush1.msra.mxu0 0.0
    %114 = vmatprep.subr.mxu0 0.0
    %115 = vmatpush1.msra.mxu0 0.0
    %116 = vmatprep.subr.mxu0 0.0
    %117 = vmatpush1.msra.mxu0 0.0
    %118 = vmatprep.subr.mxu0 0.0
    %119 = vmatpush1.msra.mxu0 0.0
    %120 = vmatprep.subr.mxu0 0.0
    %121 = vmatpush1.msra.mxu0 0.0
    %122 = vmatprep.subr.mxu0 0.0
    %123 = vmatpush1.msra.mxu0 0.0
    %124 = vmatprep.subr.mxu0 0.0
    %125 = vmatpush1.msra.mxu0 0.0
    %126 = vmatprep.subr.mxu0 0.0
    %127 = vmatpush1.msra.mxu0 0.0
    %128 = vmatprep.subr.mxu0 0.0
    %129 = vmatpush1.msra.mxu0 0.0
    %130 = vmatprep.subr.mxu0 0.0
    %131 = vmatpush1.msra.mxu0 0.0
    %132 = vmatprep.subr.mxu0 0.0
    %133 = vmatpush1.msra.mxu0 0.0
    %134 = vmatprep.subr.mxu0 0.0
    %135 = vmatpush1.msra.mxu0 0.0
    %136 = vmatprep.mubr.f32.mxu0 0.0
    %137 = vmatmul.mubr.f32.gmra.mrb[0].mxu0 %v48
    %v138 = vpop.f32.mrb[0].mxu0
    %v139 = vadd.f32 %v70, %v138
    %v140 = vpop.f32.mrb[0].mxu0
    %141 = vdwg.mxu0
    %v142 = vxor.u32 %v139, 2147483648
    %v143 = vmul.f32 %v142, 1.442695
    %v144 = vpow.pop %v143
    %v145 = vadd.f32 %v144, 1.0
    %v146 = vrcp.pop %v145
    %v147 = vmul.f32 1.0, %v146
    %v148 = vld [vmem:[#allocation4] sm:$0xff]
    %v149 = vld [vmem:[#allocation4 + $0x8] sm:$0xff]
    %v150 = vld [vmem:[#allocation4 + $0x10] sm:$0xff]
    %v151 = vld [vmem:[#allocation4 + $0x18] sm:$0xff]
    %v152 = vld [vmem:[#allocation4 + $0x20] sm:$0xff]
    %v153 = vld [vmem:[#allocation4 + $0x28] sm:$0xff]
    %v154 = vld [vmem:[#allocation4 + $0x30] sm:$0xff]
    %v155 = vld [vmem:[#allocation4 + $0x38] sm:$0xff]
    %v156 = vld [vmem:[#allocation4 + $0x40] sm:$0xff]
    %v157 = vld [vmem:[#allocation4 + $0x48] sm:$0xff]
    %v158 = vld [vmem:[#allocation4 + $0x50] sm:$0xff]
    %v159 = vld [vmem:[#allocation4 + $0x58] sm:$0xff]
    %v160 = vld [vmem:[#allocation4 + $0x60] sm:$0xff]
    %v161 = vld [vmem:[#allocation4 + $0x68] sm:$0xff]
    %v162 = vld [vmem:[#allocation4 + $0x70] sm:$0xff]
    %v163 = vld [vmem:[#allocation4 + $0x78] sm:$0xff]
    %v164 = vld [vmem:[%s4] sm:$0x1]
    %v166 = vlaneseq
    %v167 = vshrl.u32 %v166, 7
    %v168 = vsub.s32 0, %v167
    %v169 = vrot.slane %v164, %v168
    %171 = vmatprep.subr.mxu0 0.0
    %172 = vmatpush1.msra.mxu0 %v148
    %173 = vmatprep.subr.mxu0 0.0
    %174 = vmatpush1.msra.mxu0 %v149
    %175 = vmatprep.subr.mxu0 0.0
    %176 = vmatpush1.msra.mxu0 %v150
    %177 = vmatprep.subr.mxu0 0.0
    %178 = vmatpush1.msra.mxu0 %v151
    %179 = vmatprep.subr.mxu0 0.0
    %180 = vmatpush1.msra.mxu0 %v152
    %181 = vmatprep.subr.mxu0 0.0
    %182 = vmatpush1.msra.mxu0 %v153
    %183 = vmatprep.subr.mxu0 0.0
    %184 = vmatpush1.msra.mxu0 %v154
    %185 = vmatprep.subr.mxu0 0.0
    %186 = vmatpush1.msra.mxu0 %v155
    %187 = vmatprep.subr.mxu0 0.0
    %188 = vmatpush1.msra.mxu0 %v156
    %189 = vmatprep.subr.mxu0 0.0
    %190 = vmatpush1.msra.mxu0 %v157
    %191 = vmatprep.subr.mxu0 0.0
    %192 = vmatpush1.msra.mxu0 %v158
    %193 = vmatprep.subr.mxu0 0.0
    %194 = vmatpush1.msra.mxu0 %v159
    %195 = vmatprep.subr.mxu0 0.0
    %196 = vmatpush1.msra.mxu0 %v160
    %197 = vmatprep.subr.mxu0 0.0
    %198 = vmatpush1.msra.mxu0 %v161
    %199 = vmatprep.subr.mxu0 0.0
    %200 = vmatpush1.msra.mxu0 %v162
    %201 = vmatprep.subr.mxu0 0.0
    %202 = vmatpush1.msra.mxu0 %v163
    %203 = vmatprep.subr.mxu0 0.0
    %204 = vmatpush1.msra.mxu0 0.0
    %205 = vmatprep.subr.mxu0 0.0
    %206 = vmatpush1.msra.mxu0 0.0
    %207 = vmatprep.subr.mxu0 0.0
    %208 = vmatpush1.msra.mxu0 0.0
    %209 = vmatprep.subr.mxu0 0.0
    %210 = vmatpush1.msra.mxu0 0.0
    %211 = vmatprep.subr.mxu0 0.0
    %212 = vmatpush1.msra.mxu0 0.0
    %213 = vmatprep.subr.mxu0 0.0
    %214 = vmatpush1.msra.mxu0 0.0
    %215 = vmatprep.subr.mxu0 0.0
    %216 = vmatpush1.msra.mxu0 0.0
    %217 = vmatprep.subr.mxu0 0.0
    %218 = vmatpush1.msra.mxu0 0.0
    %219 = vmatprep.subr.mxu0 0.0
    %220 = vmatpush1.msra.mxu0 0.0
    %221 = vmatprep.subr.mxu0 0.0
    %222 = vmatpush1.msra.mxu0 0.0
    %223 = vmatprep.subr.mxu0 0.0
    %224 = vmatpush1.msra.mxu0 0.0
    %225 = vmatprep.subr.mxu0 0.0
    %226 = vmatpush1.msra.mxu0 0.0
    %227 = vmatprep.subr.mxu0 0.0
    %228 = vmatpush1.msra.mxu0 0.0
    %229 = vmatprep.subr.mxu0 0.0
    %230 = vmatpush1.msra.mxu0 0.0
    %231 = vmatprep.subr.mxu0 0.0
    %232 = vmatpush1.msra.mxu0 0.0
    %233 = vmatprep.subr.mxu0 0.0
    %234 = vmatpush1.msra.mxu0 0.0
    %235 = vmatprep.mubr.f32.mxu0 0.0
    %236 = vmatmul.mubr.f32.gmra.mrb[0].mxu0 %v147
    %v237 = vpop.f32.mrb[0].mxu0
    %v238 = vadd.f32 %v169, %v237
    %v239 = vpop.f32.mrb[0].mxu0
    %240 = vdwg.mxu0
    %v241 = vrot.slane %v238, 4
    %v242 = vmax.f32 %v238, %v241
    %v243 = vrot.slane %v242, 2
    %v244 = vmax.f32 %v242, %v243
    %v245 = vrot.slane %v244, 1
    %v246 = vmax.f32 %v244, %v245
    %v247 = vsub.f32 %v238, %v246
    %v248 = vmul.f32 %v247, 1.442695
    %v249 = vpow.pop %v248
    %v250 = vlaneseq
    %v251 = vshrl.u32 %v250, 7
    %vm252 = vcmp.lt.s32.totalorder %v251, 2
    %v253 = vsel %vm252, 1, 0
    %v254 = vcvt.s32.f32 %v253
    %v255 = vmul.f32 %v249, %v254
    %v256 = vrot.slane %v255, 4
    %v257 = vadd.f32 %v255, %v256
    %v258 = vrot.slane %v257, 2
    %v259 = vadd.f32 %v257, %v258
    %v260 = vrot.slane %v259, 1
    %v261 = vadd.f32 %v259, %v260
    %v262 = vrcp.pop %v261
    %v263 = vmul.f32 %v255, %v262
    %264 = vst [vmem:[%s5] sm:$0xff] %v263
    // Predicated region
    $region30: #{mlp_cls_forward.1} parent=1 // pred_check
      _
    $region31: #{mlp_cls_forward.1} parent=1 // pred_check_branch
      %266 = sbr.rel (0) target = $region33
    $region32: #{mlp_cls_forward.1} parent=1 // pred_region
      _
    $region33: #{mlp_cls_forward.1} parent=1 // pred_fallthru
      _
    // Predicated region
    $region34: #{mlp_cls_forward.1} parent=1 // pred_check
      _
    $region35: #{mlp_cls_forward.1} parent=1 // pred_check_branch
      %268 = sbr.rel (0) target = $region37
    $region36: #{mlp_cls_forward.1} parent=1 // pred_region
      _
    $region37: #{mlp_cls_forward.1} parent=1 // pred_fallthru
      _
    %269 = vsyncpa [#allocation3], 1
    %270 = vsyncpa [#allocation5], 1

</llo_original>
